<compile_context>
chip_gen: v7x
topology: tpu7x:2x2x1
jax: 0.10.0
libtpu: 0.0.40
codegen_flags: <defaults>
</compile_context>

<pallas_src>
import numpy as np
import jax
import jax.numpy as jnp
from jax.experimental import pallas as pl
from jax.experimental.pallas import tpu as pltpu


# ----------------------------------------------------------------------------
# Kernel: grid over N-tiles, resident (1,1) accumulator, SMEM scalar reward.
# Layout: policy tile (TILE_N, C) with classes on lanes; selected / rtarget as
# (TILE_N, 1) column vectors; reward_eff as a (1,) f32 scalar in SMEM.
# ----------------------------------------------------------------------------
def agent_loss_kernel(reward_ref, policy_ref, sel_ref, rt_ref, out_ref, acc_ref):
    i = pl.program_id(0)

    @pl.when(i == 0)
    def _init():
        acc_ref[...] = jnp.zeros_like(acc_ref)

    # Single upcast; all elementwise/exp math stays f32 (v5e-safe).
    x = policy_ref[...].astype(jnp.float32)                         # (TILE_N, C)

    # Numerically stable log-softmax pieces (max + logsumexp per row).
    m = jnp.max(x, axis=1, keepdims=True)                           # (TILE_N, 1)
    shifted = x - m
    lse = jnp.log(jnp.sum(jnp.exp(shifted), axis=1, keepdims=True)) # (TILE_N, 1)

    # Fused gather + mask + reduce: combined boolean mask selects exactly the
    # (row, selected[row]) entries whose rtarget is 0; one where + one reduce.
    # Note: out-of-range `selected` silently contributes 0 (PyTorch would raise).
    ids = jax.lax.broadcasted_iota(jnp.int32, x.shape, 1)           # (TILE_N, C)
    combined = (ids == sel_ref[...]) & (rt_ref[...] == 0.0)         # (TILE_N, C)
    acc_ref[...] += jnp.sum(jnp.where(combined, shifted - lse, 0.0))

    @pl.when(i == pl.num_programs(0) - 1)
    def _fin():
        out_ref[...] = -reward_ref[0] * acc_ref[...]


def agent_loss_pallas(policy, selected, rtarget, reward_eff, max_tile_n=256):
    """-reward_eff * sum(log_softmax(policy)[i, selected[i]] * (rtarget==0))."""
    n, c = policy.shape
    # Round N up to a sublane multiple (8) and pick a VMEM-friendly tile.
    n8 = ((n + 7) // 8) * 8
    tile_n = min(max_tile_n, n8)                 # always a multiple of 8
    n_pad = ((n8 + tile_n - 1) // tile_n) * tile_n
    pad = n_pad - n

    # Padding rows: policy=0, selected=0, rtarget=1.0 (non-zero -> masked out).
    pol = jnp.pad(policy.astype(jnp.float32), ((0, pad), (0, 0)))
    sel = jnp.pad(selected.astype(jnp.int32), (0, pad)).reshape(n_pad, 1)
    rt = jnp.pad(rtarget.astype(jnp.float32), (0, pad),
                 constant_values=1.0).reshape(n_pad, 1)
    rew = jnp.asarray(reward_eff, dtype=jnp.float32).reshape(1)

    out = pl.pallas_call(
        agent_loss_kernel,
        out_shape=jax.ShapeDtypeStruct((1, 1), jnp.float32),
        grid_spec=pltpu.PrefetchScalarGridSpec(
            num_scalar_prefetch=0,
            grid=(n_pad // tile_n,),
            in_specs=[
                pl.BlockSpec(memory_space=pltpu.SMEM),          # reward_eff (1,)
                pl.BlockSpec((tile_n, c), lambda i: (i, 0)),    # policy tile
                pl.BlockSpec((tile_n, 1), lambda i: (i, 0)),    # selected tile
                pl.BlockSpec((tile_n, 1), lambda i: (i, 0)),    # rtarget tile
            ],
            out_specs=pl.BlockSpec((1, 1), lambda i: (0, 0)),   # resident scalar
            scratch_shapes=[pltpu.VMEM((1, 1), jnp.float32)],   # accumulator
        ),
        compiler_params=pltpu.CompilerParams(
            dimension_semantics=("arbitrary",)),                # reduction axis
    )(rew, pol, sel, rt)
    return out[0, 0]


# ----------------------------------------------------------------------------
# Module wrapper: device-resident reward baseline (ring buffer), fully jitted.
# ----------------------------------------------------------------------------
def _make_loss_fn(window, max_tile_n=256):
    def loss_fn(policy, selected, rtarget, reward, rewards_buf, count):
        reward = jnp.asarray(reward, jnp.float32)
        n_hist = jnp.minimum(count, window).astype(jnp.float32)
        baseline = jnp.sum(rewards_buf) / jnp.maximum(n_hist, 1.0)
        reward_eff = jnp.where(count > 0, reward - baseline, 0.0)
        return agent_loss_pallas(policy, selected, rtarget, reward_eff,
                                 max_tile_n=max_tile_n)
    return jax.jit(loss_fn)


def _make_update_fn(window):
    def update_fn(rewards_buf, count, reward):
        idx = jnp.mod(count, window)
        buf = rewards_buf.at[idx].set(jnp.asarray(reward, jnp.float32))
        return buf, count + 1
    return jax.jit(update_fn)


class AgentLoss:
    """JAX/Pallas port of denoise/rl.py:AgentLoss (sliding-window baseline).

    The Python-list rewards history is replaced by a device-side ring buffer
    of the same `window` semantics, so each forward() is one jitted program.
    """

    def __init__(self, window=5):
        self.window = window
        self.rewards_buf = jnp.zeros((window,), jnp.float32)
        self.count = jnp.array(0, jnp.int32)
        self._loss_fn = _make_loss_fn(window)
        self._update_fn = _make_update_fn(window)

    def forward(self, policy, selected, rtarget, reward):
        return self._loss_fn(policy, selected, rtarget, reward,
                             self.rewards_buf, self.count)

    def update(self, reward):
        self.rewards_buf, self.count = self._update_fn(
            self.rewards_buf, self.count, reward)


# ----------------------------------------------------------------------------
# Reference + self-test
# ----------------------------------------------------------------------------
def _reference(policy, selected, rtarget, reward_eff):
    log_p = jax.nn.log_softmax(policy.astype(jnp.float32), axis=1)
    log_p_sel = log_p[jnp.arange(policy.shape[0]), selected]
    mask_p = (rtarget == 0).astype(jnp.float32)
    return -reward_eff * jnp.sum(log_p_sel * mask_p)


if __name__ == "__main__":
    key = jax.random.PRNGKey(0)
    k1, k2, k3, k4, k5, k6 = jax.random.split(key, 6)

    N, C = 8, 32  # batch of 8 decisions over 32 actions
    policy = jax.random.normal(k1, (N, C), dtype=jnp.float32)
    selected = jax.random.randint(k2, (N,), 0, C, dtype=jnp.int32)
    # rtarget: mix of zeros and non-zeros so the mask is non-trivial.
    rtarget = (jax.random.uniform(k3, (N,)) > 0.5).astype(jnp.float32) * 2.0
    reward = 1.5

    loss_mod = AgentLoss(window=5)

    # Case 1: empty rewards history -> effective reward 0 -> loss 0.
    out0 = jax.block_until_ready(loss_mod.forward(policy, selected, rtarget, reward))
    assert float(out0) == 0.0

    # Case 2: non-empty history -> baseline = mean([0.25, 0.75]) = 0.5.
    loss_mod.update(0.25)
    loss_mod.update(0.75)
    out1 = jax.block_until_ready(loss_mod.forward(policy, selected, rtarget, reward))
    ref1 = _reference(policy, selected, rtarget, reward - 0.5)
    np.testing.assert_allclose(np.asarray(out1), np.asarray(ref1),
                               rtol=1e-5, atol=1e-5)

    # Case 3: exercise the N-grid + padding path (N=20 -> padded to 24, 3 tiles).
    N2 = 20
    policy2 = jax.random.normal(k4, (N2, C), dtype=jnp.float32)
    selected2 = jax.random.randint(k5, (N2,), 0, C, dtype=jnp.int32)
    rtarget2 = (jax.random.uniform(k6, (N2,)) > 0.5).astype(jnp.float32) * 2.0
    gridded = jax.jit(
        lambda p, s, r, re: agent_loss_pallas(p, s, r, re, max_tile_n=8))
    out2 = jax.block_until_ready(gridded(policy2, selected2, rtarget2, 1.0))
    ref2 = _reference(policy2, selected2, rtarget2, 1.0)
    np.testing.assert_allclose(np.asarray(out2), np.asarray(ref2),
                               rtol=1e-5, atol=1e-5)

    # TODO(synk): PyTorch would raise on out-of-range `selected`; here such rows
    # silently contribute 0 (a pl.debug_check could be added under
    # pl.enable_debug_checks if strict parity on invalid indices is required).

    print("KERNEL_OK")
</pallas_src>

<mosaic_0001>
module attributes {stable_mosaic.version = 11 : i64} {
  func.func @agent_loss_kernel(%arg0: i32, %arg1: memref<1xf32, #tpu.memory_space<smem>>, %arg2: memref<8x32xf32, #tpu.memory_space<vmem>>, %arg3: memref<8x1xi32, #tpu.memory_space<vmem>>, %arg4: memref<8x1xf32, #tpu.memory_space<vmem>>, %arg5: memref<1x1xf32, #tpu.memory_space<vmem>>, %arg6: memref<1x1xf32, #tpu.memory_space<vmem>>) attributes {dimension_semantics = [#tpu.dimension_semantics<arbitrary>], iteration_bounds = array<i64: 1>, scalar_prefetch = 0 : i64, scratch_operands = 1 : i64, tpu.core_type = #tpu.core_type<tc>, window_params = [{transform_indices = @transform_0, window_bounds = array<i64: 1>}, {transform_indices = @transform_1, window_bounds = array<i64: 8, 32>}, {transform_indices = @transform_2, window_bounds = array<i64: 8, 1>}, {transform_indices = @transform_3, window_bounds = array<i64: 8, 1>}, {pipeline_mode = #tpu.pipeline_mode<synchronous>, transform_indices = @transform_4, window_bounds = array<i64: 1, 1>}]} {
    %c0_i32 = arith.constant 0 : i32
    %0 = arith.cmpi eq, %arg0, %c0_i32 : i32
    %1 = arith.extui %0 : i1 to i32
    %c0_i32_0 = arith.constant 0 : i32
    %2 = arith.cmpi ne, %1, %c0_i32_0 : i32
    scf.if %2 {
      %cst_16 = arith.constant 0.000000e+00 : f32
      %36 = vector.broadcast %cst_16 : f32 to vector<1x1xf32>
      %c0_17 = arith.constant 0 : index
      %c0_18 = arith.constant 0 : index
      %37 = vector.load %arg6[%c0_17, %c0_18] : memref<1x1xf32, #tpu.memory_space<vmem>>, vector<1x1xf32>
      tpu.vector_store %arg6[%c0_17, %c0_18], %36 {strides = array<i32>} : memref<1x1xf32, #tpu.memory_space<vmem>>, vector<1x1xf32>,
    } else {
    }
    %c0 = arith.constant 0 : index
    %c0_1 = arith.constant 0 : index
    %3 = vector.load %arg2[%c0, %c0_1] : memref<8x32xf32, #tpu.memory_space<vmem>>, vector<8x32xf32>
    %cst = arith.constant dense<0xFF800000> : vector<8xf32>
    %4 = vector.multi_reduction <maximumf>, %3, %cst [1] : vector<8x32xf32> to vector<8xf32>
    %5 = vector.shape_cast %4 : vector<8xf32> to vector<8x1xf32>
    %6 = vector.broadcast %5 : vector<8x1xf32> to vector<8x32xf32>
    %7 = arith.subf %3, %6 : vector<8x32xf32>
    %8 = math.exp %7 : vector<8x32xf32>
    %cst_2 = arith.constant dense<0.000000e+00> : vector<8xf32>
    %9 = vector.multi_reduction <add>, %8, %cst_2 [1] : vector<8x32xf32> to vector<8xf32>
    %10 = vector.shape_cast %9 : vector<8xf32> to vector<8x1xf32>
    %11 = math.log %10 : vector<8x1xf32>
    %12 = tpu.iota {dimensions = array<i32: 1>} : vector<8x32xi32>
    %c0_3 = arith.constant 0 : index
    %c0_4 = arith.constant 0 : index
    %13 = vector.load %arg3[%c0_3, %c0_4] : memref<8x1xi32, #tpu.memory_space<vmem>>, vector<8x1xi32>
    %14 = vector.broadcast %13 : vector<8x1xi32> to vector<8x32xi32>
    %15 = arith.cmpi eq, %12, %14 : vector<8x32xi32>
    %c0_5 = arith.constant 0 : index
    %c0_6 = arith.constant 0 : index
    %16 = vector.load %arg4[%c0_5, %c0_6] : memref<8x1xf32, #tpu.memory_space<vmem>>, vector<8x1xf32>
    %cst_7 = arith.constant 0.000000e+00 : f32
    %17 = vector.broadcast %cst_7 : f32 to vector<8x1xf32>
    %18 = arith.cmpf oeq, %16, %17 : vector<8x1xf32>
    %19 = vector.broadcast %18 : vector<8x1xi1> to vector<8x32xi1>
    %20 = arith.andi %15, %19 : vector<8x32xi1>
    %c0_8 = arith.constant 0 : index
    %c0_9 = arith.constant 0 : index
    %21 = vector.load %arg6[%c0_8, %c0_9] : memref<1x1xf32, #tpu.memory_space<vmem>>, vector<1x1xf32>
    %22 = vector.broadcast %11 : vector<8x1xf32> to vector<8x32xf32>
    %23 = arith.subf %7, %22 : vector<8x32xf32>
    %cst_10 = arith.constant 0.000000e+00 : f32
    %24 = vector.broadcast %cst_10 : f32 to vector<8x32xf32>
    %25 = arith.select %20, %23, %24 : vector<8x32xi1>, vector<8x32xf32>
    %26 = vector.shape_cast %25 : vector<8x32xf32> to vector<1x8x32xf32>
    %cst_11 = arith.constant dense<0.000000e+00> : vector<1xf32>
    %27 = vector.multi_reduction <add>, %26, %cst_11 [1, 2] : vector<1x8x32xf32> to vector<1xf32>
    %28 = vector.shape_cast %27 : vector<1xf32> to vector<1x1x1xf32>
    %29 = vector.extract %28[0, 0, 0] : f32 from vector<1x1x1xf32>
    %30 = vector.broadcast %29 : f32 to vector<1x1xf32>
    %31 = arith.addf %21, %30 : vector<1x1xf32>
    %c0_12 = arith.constant 0 : index
    %c0_13 = arith.constant 0 : index
    %32 = vector.load %arg6[%c0_12, %c0_13] : memref<1x1xf32, #tpu.memory_space<vmem>>, vector<1x1xf32>
    tpu.vector_store %arg6[%c0_12, %c0_13], %31 {strides = array<i32>} : memref<1x1xf32, #tpu.memory_space<vmem>>, vector<1x1xf32>,
    %c0_i32_14 = arith.constant 0 : i32
    %33 = arith.cmpi eq, %arg0, %c0_i32_14 : i32
    %34 = arith.extui %33 : i1 to i32
    %c0_i32_15 = arith.constant 0 : i32
    %35 = arith.cmpi ne, %34, %c0_i32_15 : i32
    scf.if %35 {
      %c0_16 = arith.constant 0 : index
      %36 = memref.load %arg1[%c0_16] : memref<1xf32, #tpu.memory_space<smem>>
      %cst_17 = arith.constant 0.000000e+00 : f32
      %37 = arith.subf %cst_17, %36 : f32
      %c0_18 = arith.constant 0 : index
      %c0_19 = arith.constant 0 : index
      %38 = vector.load %arg6[%c0_18, %c0_19] : memref<1x1xf32, #tpu.memory_space<vmem>>, vector<1x1xf32>
      %39 = vector.broadcast %37 : f32 to vector<1x1xf32>
      %40 = arith.mulf %39, %38 : vector<1x1xf32>
      %c0_20 = arith.constant 0 : index
      %c0_21 = arith.constant 0 : index
      %41 = vector.load %arg5[%c0_20, %c0_21] : memref<1x1xf32, #tpu.memory_space<vmem>>, vector<1x1xf32>
      tpu.vector_store %arg5[%c0_20, %c0_21], %40 {strides = array<i32>} : memref<1x1xf32, #tpu.memory_space<vmem>>, vector<1x1xf32>,
    } else {
    }
    return
  }
  func.func @transform_0(%arg0: i32) -> i32 {
    %c0_i32 = arith.constant 0 : i32
    %c0_i32_0 = arith.constant 0 : i32
    return %c0_i32 : i32
  }
  func.func @transform_1(%arg0: i32) -> (i32, i32) {
    %c0_i32 = arith.constant 0 : i32
    %c0_i32_0 = arith.constant 0 : i32
    return %arg0, %c0_i32 : i32, i32
  }
  func.func @transform_2(%arg0: i32) -> (i32, i32) {
    %c0_i32 = arith.constant 0 : i32
    %c0_i32_0 = arith.constant 0 : i32
    return %arg0, %c0_i32 : i32, i32
  }
  func.func @transform_3(%arg0: i32) -> (i32, i32) {
    %c0_i32 = arith.constant 0 : i32
    %c0_i32_0 = arith.constant 0 : i32
    return %arg0, %c0_i32 : i32, i32
  }
  func.func @transform_4(%arg0: i32) -> (i32, i32) {
    %c0_i32 = arith.constant 0 : i32
    %c0_i32_0 = arith.constant 0 : i32
    %c0_i32_1 = arith.constant 0 : i32
    return %c0_i32, %c0_i32_0 : i32, i32
  }
}

</mosaic_0001>

<llo_original>
// kernel: loss_fn.1
$region0: #{loss_fn.1}
  #allocation0 [shape = 'u32[]', space=smem, size = 0x4, offset = 0x4, fixed_abs, tag = 'smem constant byte address 0x4 - core index']
  #allocation1 [shape = 'u32[144,128]{1,0:T(1,128)}', space=vmem, size = 0x12000, scoped, tag = 'internal scratch']
  #allocation2 [shape = 'f32[1,1]{1,0:T(1,128)}', space=vmem, size = 0x200, scoped, tag = 'scratch operand']
  #allocation3 [shape = 'f32[1]{0:T(128)S(6)}', space=smem, size = 0x200, scoped, tag = 'scoped memory for loss_fn.1']
  %s0 = inlined_call_operand.<no memory space> [shape: f32[1], index: 0, kind: input, shape index: {}]
  %s1 = inlined_call_operand.vmem [shape: f32[8,32], index: 1, kind: input, shape index: {}]
  %s2 = inlined_call_operand.vmem [shape: s32[8,1], index: 2, kind: input, shape index: {}]
  %s3 = inlined_call_operand.vmem [shape: f32[8,1], index: 3, kind: input, shape index: {}]
  %s4 = inlined_call_operand.hbm [shape: f32[1,1], index: 4, kind: output, shape index: {}]
  %s5 = sld [smem:[#allocation0]]
  $region34: #{loss_fn.1} parent=0
    _
  %s7 = ssub.s32 1, %s5
  %s8 = scalar_select 0, %s7, %s5
  %9 = sst [smem:[#allocation3]] %s0
  $region1: #{loss_fn.1} parent=0
    #allocation4 [shape = 'u8[512]{0}', space=vmem, size = 0x400, scoped, tag = 'output window, operand 0, single buffered']
    #allocation5 [shape = 's32[1]{0}', space=sflag, size = 0x4, scoped, tag = 'scoped memory for loss_fn.1']
    %10 = vsyncpa [#allocation5], 0
    // Predicated region
    $region2: #{loss_fn.1} parent=1 // pred_check
      _
    $region3: #{loss_fn.1} parent=1 // pred_check_branch
      %12 = sbr.rel (0) target = $region5
    $region4: #{loss_fn.1} parent=1 // pred_region
      _
    $region5: #{loss_fn.1} parent=1 // pred_fallthru
      _
    // Predicated region
    $region6: #{loss_fn.1} parent=1 // pred_check
      _
    $region7: #{loss_fn.1} parent=1 // pred_check_branch
      %14 = sbr.rel (0) target = $region9
    $region8: #{loss_fn.1} parent=1 // pred_region
      _
    $region9: #{loss_fn.1} parent=1 // pred_fallthru
      _
    // Predicated region
    $region10: #{loss_fn.1} parent=1 // pred_check
      _
    $region11: #{loss_fn.1} parent=1 // pred_check_branch
      %16 = sbr.rel (0) target = $region13
    $region12: #{loss_fn.1} parent=1 // pred_region
      _
    $region13: #{loss_fn.1} parent=1 // pred_fallthru
      _
    // Predicated region
    $region14: #{loss_fn.1} parent=1 // pred_check
      _
    $region15: #{loss_fn.1} parent=1 // pred_check_branch
      %18 = sbr.rel (0) target = $region17
    $region16: #{loss_fn.1} parent=1 // pred_region
      _
    $region17: #{loss_fn.1} parent=1 // pred_fallthru
      _
    %p19 = scmp.eq.s32.totalorder 0, 0
    // Predicated region
    $region18: #{loss_fn.1} parent=1 // pred_check
      %p20 = pneg %p19
    $region19: #{loss_fn.1} parent=1 // pred_check_branch
      %22 = sbr.rel (%p20) target = $region21
    $region20: #{loss_fn.1} parent=1 // pred_region
      %vm23 = vcmask 0
      %24 = vst.msk [vmem:[#allocation2] sm:$0x1] %vm23, 0.0
    $region21: #{loss_fn.1} parent=1 // pred_fallthru
      _
    %v25 = vld [vmem:[%s1] sm:$0xff]
    %vm26 = vcmask 261120
    %v27 = vsel %vm26, %v25, -inf
    %28 = vmax.xlane.f32.xlu0 %v27
    %v29 = vpop.xlane.xlu0 %28
    %v30 = vsub.f32 %v25, %v29
    %v31 = vmul.f32 %v30, 1.442695
    %v32 = vpow.pop %v31
    %v33 = vsel %vm26, %v32, 0.0
    %34 = vadd.xlane.f32.xlu0 %v33
    %v35 = vpop.xlane.xlu0 %34
    %v36 = vlog2.pop %v35
    %v37 = vmul.f32 %v36, 0.6931472
    %v38 = vlaneseq
    %v39 = vand.u32 %v38, 127
    %v40 = vld [vmem:[%s2] sm:$0xff]
    %41 = vset.pattern.permute.xlu0 0
    %42 = vperm.xlu0 %41, %v40
    %v43 = vpop.permute.xlu0 %42
    %vm44 = vcmp.eq.s32.totalorder %v39, %v43
    %v45 = vld [vmem:[%s3] sm:$0xff]
    %vm46 = vcmp.eq.f32.partialorder %v45, 0.0
    %v47 = vsel %vm46, 1, 0
    %48 = vset.pattern.permute.xlu0 0
    %49 = vperm.xlu0 %48, %v47
    %v50 = vpop.permute.xlu0 %49
    %vm51 = vcmp.eq.s32.totalorder %v50, 1
    %vm52 = vmand %vm44, %vm51
    %v53 = vld [vmem:[#allocation2] sm:$0x1]
    %v54 = vsub.f32 %v30, %v37
    %v55 = vsel %vm52, %v54, 0.0
    %v56 = vsel %vm26, %v55, 0.0
    %57 = vadd.xlane.f32.xlu0 %v56
    %v58 = vpop.xlane.xlu0 %57
    %v59 = vrot.slane %v58, 4
    %v60 = vadd.f32 %v58, %v59
    %v61 = vrot.slane %v60, 2
    %v62 = vadd.f32 %v60, %v61
    %v63 = vrot.slane %v62, 1
    %v64 = vadd.f32 %v62, %v63
    %s65 = vtos %v64
    %v66 = vstv %s65
    %v67 = vadd.f32 %v53, %v66
    %vm68 = vcmask 0
    %69 = vst.msk [vmem:[#allocation2] sm:$0x1] %vm68, %v67
    // Predicated region
    $region22: #{loss_fn.1} parent=1 // pred_check
      %p70 = pneg %p19
    $region23: #{loss_fn.1} parent=1 // pred_check_branch
      %72 = sbr.rel (%p70) target = $region25
    $region24: #{loss_fn.1} parent=1 // pred_region
      %s73 = sld [smem:[#allocation3]]
      %s74 = ssub.f32 0.0, %s73
      %v75 = vld [vmem:[#allocation2] sm:$0x1]
      %v76 = vstv %s74
      %v77 = vmul.f32 %v76, %v75
      %78 = vst.msk [vmem:[#allocation4] sm:$0x1] %vm68, %v77
    $region25: #{loss_fn.1} parent=1 // pred_fallthru
      _
    // Predicated region
    $region26: #{loss_fn.1} parent=1 // pred_check
      _
    $region27: #{loss_fn.1} parent=1 // pred_check_branch
      %80 = sbr.rel (0) target = $region29
    $region28: #{loss_fn.1} parent=1 // pred_region
      %s82 = ssub.s32 16, 16
      %83 = vsyncadd [#allocation5], %s82
      %s85 = sshll.u32 [#allocation4], 4
      %s86 = int_to_ptr.vmem [resolvable:$true] %s85
      %88 = dma.vmem_to_hbm [thread:$0]  %s86, 16, %s4, [#allocation5]
    $region29: #{loss_fn.1} parent=1 // pred_fallthru
      _
    // Predicated region
    $region30: #{loss_fn.1} parent=1 // pred_check
      _
    $region31: #{loss_fn.1} parent=1 // pred_check_branch
      %90 = sbr.rel (0) target = $region33
    $region32: #{loss_fn.1} parent=1 // pred_region
      %91 = dma.done [#allocation5], 16
    $region33: #{loss_fn.1} parent=1 // pred_fallthru
      _
    %92 = vsyncpa [#allocation5], 1

</llo_original>
